<compile_context>
chip_gen: v6e
topology: v6e:2x2x1
jax: 0.10.0
libtpu: 0.0.40
codegen_flags: <defaults>
</compile_context>

<pallas_src>
import functools

import jax
import jax.numpy as jnp
from jax.experimental import pallas as pl
from jax.experimental.pallas import tpu as pltpu

_COMPUTE_DTYPE = jnp.bfloat16  # MXU-native on v5e/v6e/v7x; halves HBM traffic.


def _round_up(x, m):
    return ((x + m - 1) // m) * m


def _pick_batch_tile(B, L_pad, D, A):
    """Pick a batch tile that keeps the double-buffered block + f32
    intermediates well inside VMEM (conservative for v7x's 64 MiB)."""
    per_row = L_pad * D * 2 * 2          # encoder block in bf16, 2 pipeline buffers
    per_row += 2 * L_pad * A * 4         # att1 + relu'd h in f32
    per_row += 8 * L_pad                 # scores / alpha rows
    budget = 24 * 1024 * 1024            # soft target; hard limit set to 48 MiB below
    tb = max(1, budget // max(per_row, 1))
    if tb >= B:
        return B                          # single-block batch dim == full array: OK
    return max(8, (tb // 8) * 8)          # keep the sublane dim a multiple of 8


def _attention_kernel(enc_ref, hid_ref, we_ref, wd_ref, bias_ref, wf_ref,
                      awe_ref, alpha_ref, *, l_valid):
    TB, L, D = enc_ref.shape              # L is the padded num_pixels
    A = we_ref.shape[1]

    enc = enc_ref[...]                                              # (TB, L, D) bf16

    # att1 = encoder_att(encoder_out): 2-D MXU matmul. The reshape is a free
    # view because L is padded to a multiple of 8 (128 here).
    att1 = jnp.dot(enc.reshape(TB * L, D), we_ref[...],
                   preferred_element_type=jnp.float32).reshape(TB, L, A)

    # att2 = decoder_att(decoder_hidden); b_enc + b_dec folded into one bias
    # added to the small (TB, A) tensor instead of the big (TB, L, A) one.
    att2 = jnp.dot(hid_ref[...], wd_ref[...],
                   preferred_element_type=jnp.float32) + bias_ref[...]   # (TB, A)

    h = jnp.maximum(att1 + att2[:, None, :], 0.0)                   # (TB, L, A) f32

    # full_att: output width 1 -> VPU multiply + XLU lane reduce instead of an
    # N=1 MXU matmul (b_full omitted: it is a no-op under the softmax).
    scores = jnp.sum(h * wf_ref[...][None, :, :], axis=-1)          # (TB, L) f32

    # Mask padded pixel positions before the softmax over num_pixels.
    col = jax.lax.broadcasted_iota(jnp.int32, (TB, L), 1)
    scores = jnp.where(col < l_valid, scores, -1e30)

    m = jnp.max(scores, axis=-1, keepdims=True)
    e = jnp.exp(scores - m)
    alpha = e / jnp.sum(e, axis=-1, keepdims=True)                  # (TB, L) f32

    # attention_weighted_encoding: batched MXU contraction over L
    # (padded positions contribute alpha == 0, so they drop out).
    awe = jnp.einsum('bql,bld->bqd',
                     alpha[:, None, :].astype(enc.dtype), enc,
                     preferred_element_type=jnp.float32)[:, 0, :]   # (TB, D) f32

    awe_ref[...] = awe.astype(awe_ref.dtype)
    alpha_ref[...] = alpha.astype(alpha_ref.dtype)


def _attention_forward_impl(encoder_out, decoder_hidden, params):
    B, L, D = encoder_out.shape
    Ddec = decoder_hidden.shape[1]
    A = params["W_enc"].shape[0]

    # Pad num_pixels to a lane-dense multiple of 128; pad batch to the tile.
    L_pad = _round_up(L, 128)
    TB = _pick_batch_tile(B, L_pad, D, A)
    B_pad = _round_up(B, TB)

    enc = encoder_out
    hid = decoder_hidden
    if L_pad != L or B_pad != B:
        enc = jnp.pad(enc, ((0, B_pad - B), (0, L_pad - L), (0, 0)))
    if B_pad != B:
        hid = jnp.pad(hid, ((0, B_pad - B), (0, 0)))

    # Layout plumbing (folded by jit): pre-transpose weights to (in, out),
    # cast matmul operands to bf16, fold the two attention biases together.
    enc = enc.astype(_COMPUTE_DTYPE)
    hid = hid.astype(_COMPUTE_DTYPE)
    we_t = params["W_enc"].T.astype(_COMPUTE_DTYPE)                 # (D_enc, A)
    wd_t = params["W_dec"].T.astype(_COMPUTE_DTYPE)                 # (D_dec, A)
    bias = (params["b_enc"] + params["b_dec"])[None, :].astype(jnp.float32)  # (1, A)
    wf_row = params["W_full"].astype(jnp.float32)                   # (1, A)
    # b_full intentionally dropped: constant shift is invariant under softmax.

    grid = (B_pad // TB,)
    kernel = functools.partial(_attention_kernel, l_valid=L)

    awe, alpha = pl.pallas_call(
        kernel,
        out_shape=(
            jax.ShapeDtypeStruct((B_pad, D), jnp.float32),
            jax.ShapeDtypeStruct((B_pad, L_pad), jnp.float32),
        ),
        grid=grid,
        in_specs=[
            pl.BlockSpec((TB, L_pad, D), lambda i: (i, 0, 0)),      # encoder_out tile
            pl.BlockSpec((TB, Ddec), lambda i: (i, 0)),             # decoder_hidden tile
            pl.BlockSpec((D, A), lambda i: (0, 0)),                 # W_enc^T (replicated)
            pl.BlockSpec((Ddec, A), lambda i: (0, 0)),              # W_dec^T (replicated)
            pl.BlockSpec((1, A), lambda i: (0, 0)),                 # b_enc + b_dec
            pl.BlockSpec((1, A), lambda i: (0, 0)),                 # W_full row
        ],
        out_specs=(
            pl.BlockSpec((TB, D), lambda i: (i, 0)),
            pl.BlockSpec((TB, L_pad), lambda i: (i, 0)),
        ),
        compiler_params=pltpu.CompilerParams(
            dimension_semantics=("parallel",),        # megacore split on v7x
            vmem_limit_bytes=48 * 1024 * 1024,        # > 32 MiB default, < v7x 64 MiB
        ),
    )(enc, hid, we_t, wd_t, bias, wf_row)

    return awe[:B], alpha[:B, :L]


# jit so the wrapper-side transposes / casts / pads fuse into one dispatch
# instead of materializing per decode-step copies in HBM.
attention_forward = jax.jit(_attention_forward_impl)


def _reference(encoder_out, decoder_hidden, params):
    att1 = encoder_out @ params["W_enc"].T + params["b_enc"]
    att2 = decoder_hidden @ params["W_dec"].T + params["b_dec"]
    h = jnp.maximum(att1 + att2[:, None, :], 0.0)
    att = (h @ params["W_full"].T + params["b_full"])[..., 0]
    alpha = jax.nn.softmax(att, axis=1)
    awe = (encoder_out * alpha[:, :, None]).sum(axis=1)
    return awe, alpha


if __name__ == "__main__":
    B, L = 2, 8                 # batch, num_pixels
    encoder_dim, decoder_dim, attention_dim = 32, 32, 32

    key = jax.random.PRNGKey(0)
    k = jax.random.split(key, 8)

    # Deterministic synthetic parameters (PyTorch nn.Linear shapes).
    params = {
        "W_enc":  jax.random.normal(k[0], (attention_dim, encoder_dim), jnp.float32) * 0.1,
        "b_enc":  jax.random.normal(k[1], (attention_dim,), jnp.float32) * 0.1,
        "W_dec":  jax.random.normal(k[2], (attention_dim, decoder_dim), jnp.float32) * 0.1,
        "b_dec":  jax.random.normal(k[3], (attention_dim,), jnp.float32) * 0.1,
        "W_full": jax.random.normal(k[4], (1, attention_dim), jnp.float32) * 0.1,
        "b_full": jax.random.normal(k[5], (1,), jnp.float32) * 0.1,
    }

    encoder_out = jax.random.normal(k[6], (B, L, encoder_dim), jnp.float32)
    decoder_hidden = jax.random.normal(k[7], (B, decoder_dim), jnp.float32)

    awe, alpha = attention_forward(encoder_out, decoder_hidden, params)
    jax.block_until_ready((awe, alpha))

    awe_ref, alpha_ref = _reference(encoder_out, decoder_hidden, params)
    # bf16 matmul inputs -> compare against the f32 reference with bf16-level tolerance.
    assert awe.shape == (B, encoder_dim) and alpha.shape == (B, L)
    assert jnp.allclose(awe, awe_ref, atol=3e-2, rtol=3e-2)
    assert jnp.allclose(alpha, alpha_ref, atol=3e-2, rtol=3e-2)
    assert jnp.allclose(jnp.sum(alpha, axis=1), jnp.ones((B,)), atol=1e-5)

    print("KERNEL_OK")
</pallas_src>

<mosaic_0001>
module attributes {stable_mosaic.version = 11 : i64} {
  func.func @_attention_kernel(%arg0: i32, %arg1: memref<2x128x32xbf16, #tpu.memory_space<vmem>>, %arg2: memref<2x32xbf16, #tpu.memory_space<vmem>>, %arg3: memref<32x32xbf16, #tpu.memory_space<vmem>>, %arg4: memref<32x32xbf16, #tpu.memory_space<vmem>>, %arg5: memref<1x32xf32, #tpu.memory_space<vmem>>, %arg6: memref<1x32xf32, #tpu.memory_space<vmem>>, %arg7: memref<2x32xf32, #tpu.memory_space<vmem>>, %arg8: memref<2x128xf32, #tpu.memory_space<vmem>>) attributes {dimension_semantics = [#tpu.dimension_semantics<parallel>], iteration_bounds = array<i64: 1>, scalar_prefetch = 0 : i64, scratch_operands = 0 : i64, tpu.core_type = #tpu.core_type<tc>, window_params = [{transform_indices = @transform_0, window_bounds = array<i64: 2, 128, 32>}, {transform_indices = @transform_1, window_bounds = array<i64: 2, 32>}, {pipeline_mode = #tpu.pipeline_mode<synchronous>, transform_indices = @transform_2, window_bounds = array<i64: 32, 32>}, {pipeline_mode = #tpu.pipeline_mode<synchronous>, transform_indices = @transform_3, window_bounds = array<i64: 32, 32>}, {pipeline_mode = #tpu.pipeline_mode<synchronous>, transform_indices = @transform_4, window_bounds = array<i64: 1, 32>}, {pipeline_mode = #tpu.pipeline_mode<synchronous>, transform_indices = @transform_5, window_bounds = array<i64: 1, 32>}, {transform_indices = @transform_6, window_bounds = array<i64: 2, 32>}, {transform_indices = @transform_7, window_bounds = array<i64: 2, 128>}]} {
    %c0 = arith.constant 0 : index
    %c0_0 = arith.constant 0 : index
    %c0_1 = arith.constant 0 : index
    %0 = vector.load %arg1[%c0, %c0_0, %c0_1] : memref<2x128x32xbf16, #tpu.memory_space<vmem>>, vector<2x128x32xbf16>
    %1 = vector.shape_cast %0 : vector<2x128x32xbf16> to vector<256x32xbf16>
    %c0_2 = arith.constant 0 : index
    %c0_3 = arith.constant 0 : index
    %2 = vector.load %arg3[%c0_2, %c0_3] : memref<32x32xbf16, #tpu.memory_space<vmem>>, vector<32x32xbf16>
    %cst = arith.constant dense<0.000000e+00> : vector<256x32xf32>
    %3 = tpu.matmul %1, %2, %cst {dimension_numbers = #tpu.dot_dimension_numbers<[1], [0], [0], [1], [0, 0, 1, 1], [], []>} : vector<256x32xbf16>, vector<32x32xbf16>, vector<256x32xf32> -> vector<256x32xf32>
    %4 = vector.shape_cast %3 : vector<256x32xf32> to vector<2x128x32xf32>
    %c0_4 = arith.constant 0 : index
    %c0_5 = arith.constant 0 : index
    %5 = vector.load %arg2[%c0_4, %c0_5] : memref<2x32xbf16, #tpu.memory_space<vmem>>, vector<2x32xbf16>
    %c0_6 = arith.constant 0 : index
    %c0_7 = arith.constant 0 : index
    %6 = vector.load %arg4[%c0_6, %c0_7] : memref<32x32xbf16, #tpu.memory_space<vmem>>, vector<32x32xbf16>
    %cst_8 = arith.constant dense<0.000000e+00> : vector<2x32xf32>
    %7 = tpu.matmul %5, %6, %cst_8 {dimension_numbers = #tpu.dot_dimension_numbers<[1], [0], [0], [1], [0, 0, 1, 1], [], []>} : vector<2x32xbf16>, vector<32x32xbf16>, vector<2x32xf32> -> vector<2x32xf32>
    %c0_9 = arith.constant 0 : index
    %c0_10 = arith.constant 0 : index
    %8 = vector.load %arg5[%c0_9, %c0_10] : memref<1x32xf32, #tpu.memory_space<vmem>>, vector<1x32xf32>
    %9 = vector.broadcast %8 : vector<1x32xf32> to vector<2x32xf32>
    %10 = arith.addf %7, %9 : vector<2x32xf32>
    %11 = vector.shape_cast %10 : vector<2x32xf32> to vector<2x1x32xf32>
    %12 = vector.broadcast %11 : vector<2x1x32xf32> to vector<2x128x32xf32>
    %13 = arith.addf %4, %12 : vector<2x128x32xf32>
    %cst_11 = arith.constant 0.000000e+00 : f32
    %14 = vector.broadcast %cst_11 : f32 to vector<2x128x32xf32>
    %15 = arith.maximumf %13, %14 : vector<2x128x32xf32>
    %c0_12 = arith.constant 0 : index
    %c0_13 = arith.constant 0 : index
    %16 = vector.load %arg6[%c0_12, %c0_13] : memref<1x32xf32, #tpu.memory_space<vmem>>, vector<1x32xf32>
    %17 = vector.shape_cast %16 : vector<1x32xf32> to vector<1x1x32xf32>
    %18 = vector.broadcast %17 : vector<1x1x32xf32> to vector<2x128x32xf32>
    %19 = arith.mulf %15, %18 : vector<2x128x32xf32>
    %cst_14 = arith.constant dense<0.000000e+00> : vector<2x128xf32>
    %20 = vector.multi_reduction <add>, %19, %cst_14 [2] : vector<2x128x32xf32> to vector<2x128xf32>
    %21 = tpu.iota {dimensions = array<i32: 1>} : vector<2x128xi32>
    %c8_i32 = arith.constant 8 : i32
    %22 = vector.broadcast %c8_i32 : i32 to vector<2x128xi32>
    %23 = arith.cmpi slt, %21, %22 : vector<2x128xi32>
    %cst_15 = arith.constant -1.000000e+30 : f32
    %24 = vector.broadcast %cst_15 : f32 to vector<2x128xf32>
    %25 = arith.select %23, %20, %24 : vector<2x128xi1>, vector<2x128xf32>
    %cst_16 = arith.constant dense<0xFF800000> : vector<2xf32>
    %26 = vector.multi_reduction <maximumf>, %25, %cst_16 [1] : vector<2x128xf32> to vector<2xf32>
    %27 = vector.shape_cast %26 : vector<2xf32> to vector<2x1xf32>
    %28 = vector.broadcast %27 : vector<2x1xf32> to vector<2x128xf32>
    %29 = arith.subf %25, %28 : vector<2x128xf32>
    %30 = math.exp %29 : vector<2x128xf32>
    %cst_17 = arith.constant dense<0.000000e+00> : vector<2xf32>
    %31 = vector.multi_reduction <add>, %30, %cst_17 [1] : vector<2x128xf32> to vector<2xf32>
    %32 = vector.shape_cast %31 : vector<2xf32> to vector<2x1xf32>
    %33 = vector.broadcast %32 : vector<2x1xf32> to vector<2x128xf32>
    %34 = arith.divf %30, %33 : vector<2x128xf32>
    %35 = vector.shape_cast %34 : vector<2x128xf32> to vector<2x1x128xf32>
    %36 = arith.truncf %35 : vector<2x1x128xf32> to vector<2x1x128xbf16>
    "tpu.trace_start"() <{level = 10 : i32, message = "bql,bld->bqd"}> : () -> ()
    %cst_18 = arith.constant dense<0.000000e+00> : vector<2x1x32xf32>
    %37 = tpu.matmul %36, %0, %cst_18 {dimension_numbers = #tpu.dot_dimension_numbers<[2], [1], [1], [2], [0, 0, 0, 1, 1, 2], [0], [0]>} : vector<2x1x128xbf16>, vector<2x128x32xbf16>, vector<2x1x32xf32> -> vector<2x1x32xf32>
    "tpu.trace_stop"() : () -> ()
    %38 = vector.shape_cast %37 : vector<2x1x32xf32> to vector<2x32xf32>
    %c0_19 = arith.constant 0 : index
    %c0_20 = arith.constant 0 : index
    %39 = vector.load %arg7[%c0_19, %c0_20] : memref<2x32xf32, #tpu.memory_space<vmem>>, vector<2x32xf32>
    tpu.vector_store %arg7[%c0_19, %c0_20], %38 {strides = array<i32>} : memref<2x32xf32, #tpu.memory_space<vmem>>, vector<2x32xf32>,
    %c0_21 = arith.constant 0 : index
    %c0_22 = arith.constant 0 : index
    %40 = vector.load %arg8[%c0_21, %c0_22] : memref<2x128xf32, #tpu.memory_space<vmem>>, vector<2x128xf32>
    tpu.vector_store %arg8[%c0_21, %c0_22], %34 {strides = array<i32>} : memref<2x128xf32, #tpu.memory_space<vmem>>, vector<2x128xf32>,
    return
  }
  func.func @transform_0(%arg0: i32) -> (i32, i32, i32) {
    %c0_i32 = arith.constant 0 : i32
    %c0_i32_0 = arith.constant 0 : i32
    %c0_i32_1 = arith.constant 0 : i32
    return %arg0, %c0_i32, %c0_i32_0 : i32, i32, i32
  }
  func.func @transform_1(%arg0: i32) -> (i32, i32) {
    %c0_i32 = arith.constant 0 : i32
    %c0_i32_0 = arith.constant 0 : i32
    return %arg0, %c0_i32 : i32, i32
  }
  func.func @transform_2(%arg0: i32) -> (i32, i32) {
    %c0_i32 = arith.constant 0 : i32
    %c0_i32_0 = arith.constant 0 : i32
    %c0_i32_1 = arith.constant 0 : i32
    return %c0_i32, %c0_i32_0 : i32, i32
  }
  func.func @transform_3(%arg0: i32) -> (i32, i32) {
    %c0_i32 = arith.constant 0 : i32
    %c0_i32_0 = arith.constant 0 : i32
    %c0_i32_1 = arith.constant 0 : i32
    return %c0_i32, %c0_i32_0 : i32, i32
  }
  func.func @transform_4(%arg0: i32) -> (i32, i32) {
    %c0_i32 = arith.constant 0 : i32
    %c0_i32_0 = arith.constant 0 : i32
    %c0_i32_1 = arith.constant 0 : i32
    return %c0_i32, %c0_i32_0 : i32, i32
  }
  func.func @transform_5(%arg0: i32) -> (i32, i32) {
    %c0_i32 = arith.constant 0 : i32
    %c0_i32_0 = arith.constant 0 : i32
    %c0_i32_1 = arith.constant 0 : i32
    return %c0_i32, %c0_i32_0 : i32, i32
  }
  func.func @transform_6(%arg0: i32) -> (i32, i32) {
    %c0_i32 = arith.constant 0 : i32
    %c0_i32_0 = arith.constant 0 : i32
    return %arg0, %c0_i32 : i32, i32
  }
  func.func @transform_7(%arg0: i32) -> (i32, i32) {
    %c0_i32 = arith.constant 0 : i32
    %c0_i32_0 = arith.constant 0 : i32
    return %arg0, %c0_i32 : i32, i32
  }
}

</mosaic_0001>

<llo_original>
// kernel: _attention_forward_impl.1
$region0: #{_attention_forward_impl.1}
  #allocation0 [shape = 'u32[]', space=smem, size = 0x4, offset = 0x4, fixed_abs, tag = 'smem constant byte address 0x4 - core index']
  #allocation1 [shape = 'u32[144,128]{1,0:T(1,128)}', space=vmem, size = 0x12000, scoped, tag = 'internal scratch']
  %s0 = inlined_call_operand.vmem [shape: bf16[2,128,32], index: 0, kind: input, shape index: {}]
  %s1 = inlined_call_operand.vmem [shape: bf16[2,32], index: 1, kind: input, shape index: {}]
  %s2 = inlined_call_operand.vmem [shape: bf16[32,32], index: 2, kind: input, shape index: {}]
  %s3 = inlined_call_operand.vmem [shape: bf16[32,32], index: 3, kind: input, shape index: {}]
  %s4 = inlined_call_operand.vmem [shape: f32[1,32], index: 4, kind: input, shape index: {}]
  %s5 = inlined_call_operand.vmem [shape: f32[1,32], index: 5, kind: input, shape index: {}]
  %s6 = inlined_call_operand.hbm [shape: f32[2,32], index: 6, kind: output, shape index: {0}]
  %s7 = inlined_call_operand.hbm [shape: f32[2,128], index: 7, kind: output, shape index: {1}]
  %8 = xla_tuple %s6, %s7
  %s9 = sld [smem:[#allocation0]]
  $region42: #{_attention_forward_impl.1} parent=0
    _
  %s11 = ssub.s32 1, %s9
  %s12 = scalar_select 0, %s11, %s9
  $region1: #{_attention_forward_impl.1} parent=0
    #allocation2 [shape = 'u8[1024]{0}', space=vmem, size = 0x400, scoped, tag = 'output window, operand 0, single buffered']
    #allocation3 [shape = 's32[1]{0}', space=sflag, size = 0x4, scoped, tag = 'scoped memory for _attention_forward_impl.1']
    #allocation4 [shape = 'u8[1024]{0}', space=vmem, size = 0x400, scoped, tag = 'output window, operand 1, single buffered']
    #allocation5 [shape = 's32[1]{0}', space=sflag, size = 0x4, scoped, tag = 'scoped memory for _attention_forward_impl.1']
    %13 = vsyncpa [#allocation3], 0
    %14 = vsyncpa [#allocation5], 0
    // Predicated region
    $region2: #{_attention_forward_impl.1} parent=1 // pred_check
      _
    $region3: #{_attention_forward_impl.1} parent=1 // pred_check_branch
      %16 = sbr.rel (0) target = $region5
    $region4: #{_attention_forward_impl.1} parent=1 // pred_region
      _
    $region5: #{_attention_forward_impl.1} parent=1 // pred_fallthru
      _
    // Predicated region
    $region6: #{_attention_forward_impl.1} parent=1 // pred_check
      _
    $region7: #{_attention_forward_impl.1} parent=1 // pred_check_branch
      %18 = sbr.rel (0) target = $region9
    $region8: #{_attention_forward_impl.1} parent=1 // pred_region
      _
    $region9: #{_attention_forward_impl.1} parent=1 // pred_fallthru
      _
    // Predicated region
    $region10: #{_attention_forward_impl.1} parent=1 // pred_check
      _
    $region11: #{_attention_forward_impl.1} parent=1 // pred_check_branch
      %20 = sbr.rel (0) target = $region13
    $region12: #{_attention_forward_impl.1} parent=1 // pred_region
      _
    $region13: #{_attention_forward_impl.1} parent=1 // pred_fallthru
      _
    // Predicated region
    $region14: #{_attention_forward_impl.1} parent=1 // pred_check
      _
    $region15: #{_attention_forward_impl.1} parent=1 // pred_check_branch
      %22 = sbr.rel (0) target = $region17
    $region16: #{_attention_forward_impl.1} parent=1 // pred_region
      _
    $region17: #{_attention_forward_impl.1} parent=1 // pred_fallthru
      _
    // Predicated region
    $region18: #{_attention_forward_impl.1} parent=1 // pred_check
      _
    $region19: #{_attention_forward_impl.1} parent=1 // pred_check_branch
      %24 = sbr.rel (0) target = $region21
    $region20: #{_attention_forward_impl.1} parent=1 // pred_region
      _
    $region21: #{_attention_forward_impl.1} parent=1 // pred_fallthru
      _
    // Predicated region
    $region22: #{_attention_forward_impl.1} parent=1 // pred_check
      _
    $region23: #{_attention_forward_impl.1} parent=1 // pred_check_branch
      %26 = sbr.rel (0) target = $region25
    $region24: #{_attention_forward_impl.1} parent=1 // pred_region
      _
    $region25: #{_attention_forward_impl.1} parent=1 // pred_fallthru
      _
    %v28 = vld [vmem:[%s0] sm:$0xf]
    %v29 = vld [vmem:[%s0 + $0x4] sm:$0xf]
    %v30 = vld [vmem:[%s0 + $0x8] sm:$0xf]
    %v31 = vld [vmem:[%s0 + $0xc] sm:$0xf]
    %v32 = vld [vmem:[%s0 + $0x10] sm:$0xf]
    %v33 = vld [vmem:[%s0 + $0x14] sm:$0xf]
    %v34 = vld [vmem:[%s0 + $0x18] sm:$0xf]
    %v35 = vld [vmem:[%s0 + $0x1c] sm:$0xf]
    %v36 = vld [vmem:[%s0 + $0x20] sm:$0xf]
    %v37 = vld [vmem:[%s0 + $0x24] sm:$0xf]
    %v38 = vld [vmem:[%s0 + $0x28] sm:$0xf]
    %v39 = vld [vmem:[%s0 + $0x2c] sm:$0xf]
    %v40 = vld [vmem:[%s0 + $0x30] sm:$0xf]
    %v41 = vld [vmem:[%s0 + $0x34] sm:$0xf]
    %v42 = vld [vmem:[%s0 + $0x38] sm:$0xf]
    %v43 = vld [vmem:[%s0 + $0x3c] sm:$0xf]
    %v44 = vld [vmem:[%s0 + $0x40] sm:$0xf]
    %v45 = vld [vmem:[%s0 + $0x44] sm:$0xf]
    %v46 = vld [vmem:[%s0 + $0x48] sm:$0xf]
    %v47 = vld [vmem:[%s0 + $0x4c] sm:$0xf]
    %v48 = vld [vmem:[%s0 + $0x50] sm:$0xf]
    %v49 = vld [vmem:[%s0 + $0x54] sm:$0xf]
    %v50 = vld [vmem:[%s0 + $0x58] sm:$0xf]
    %v51 = vld [vmem:[%s0 + $0x5c] sm:$0xf]
    %v52 = vld [vmem:[%s0 + $0x60] sm:$0xf]
    %v53 = vld [vmem:[%s0 + $0x64] sm:$0xf]
    %v54 = vld [vmem:[%s0 + $0x68] sm:$0xf]
    %v55 = vld [vmem:[%s0 + $0x6c] sm:$0xf]
    %v56 = vld [vmem:[%s0 + $0x70] sm:$0xf]
    %v57 = vld [vmem:[%s0 + $0x74] sm:$0xf]
    %v58 = vld [vmem:[%s0 + $0x78] sm:$0xf]
    %v59 = vld [vmem:[%s0 + $0x7c] sm:$0xf]
    %v60 = vld [vmem:[%s2] sm:$0xf]
    %v61 = vld [vmem:[%s2 + $0x4] sm:$0xf]
    %v62 = vld [vmem:[%s2 + $0x8] sm:$0xf]
    %v63 = vld [vmem:[%s2 + $0xc] sm:$0xf]
    %v96 = vunpack.c.l.b16 %v28
    %v97 = vunpack.c.l.b16 %v29
    %v98 = vunpack.c.l.b16 %v30
    %v99 = vunpack.c.l.b16 %v31
    %v100 = vunpack.c.l.b16 %v32
    %v101 = vunpack.c.l.b16 %v33
    %v102 = vunpack.c.l.b16 %v34
    %v103 = vunpack.c.l.b16 %v35
    %v104 = vunpack.c.l.b16 %v36
    %v105 = vunpack.c.l.b16 %v37
    %v106 = vunpack.c.l.b16 %v38
    %v107 = vunpack.c.l.b16 %v39
    %v108 = vunpack.c.l.b16 %v40
    %v109 = vunpack.c.l.b16 %v41
    %v110 = vunpack.c.l.b16 %v42
    %v111 = vunpack.c.l.b16 %v43
    %v112 = vunpack.c.l.b16 %v44
    %v113 = vunpack.c.l.b16 %v45
    %v114 = vunpack.c.l.b16 %v46
    %v115 = vunpack.c.l.b16 %v47
    %v116 = vunpack.c.l.b16 %v48
    %v117 = vunpack.c.l.b16 %v49
    %v118 = vunpack.c.l.b16 %v50
    %v119 = vunpack.c.l.b16 %v51
    %v120 = vunpack.c.l.b16 %v52
    %v121 = vunpack.c.l.b16 %v53
    %v122 = vunpack.c.l.b16 %v54
    %v123 = vunpack.c.l.b16 %v55
    %v124 = vunpack.c.l.b16 %v56
    %v125 = vunpack.c.l.b16 %v57
    %v126 = vunpack.c.l.b16 %v58
    %v127 = vunpack.c.l.b16 %v59
    %v128 = vpack.c.b16 %v97, %v96
    %v129 = vpack.c.b16 %v99, %v98
    %v130 = vpack.c.b16 %v101, %v100
    %v131 = vpack.c.b16 %v103, %v102
    %v132 = vpack.c.b16 %v105, %v104
    %v133 = vpack.c.b16 %v107, %v106
    %v134 = vpack.c.b16 %v109, %v108
    %v135 = vpack.c.b16 %v111, %v110
    %v136 = vpack.c.b16 %v113, %v112
    %v137 = vpack.c.b16 %v115, %v114
    %v138 = vpack.c.b16 %v117, %v116
    %v139 = vpack.c.b16 %v119, %v118
    %v140 = vpack.c.b16 %v121, %v120
    %v141 = vpack.c.b16 %v123, %v122
    %v142 = vpack.c.b16 %v125, %v124
    %v143 = vpack.c.b16 %v127, %v126
    %v148 = vunpack.c.l.b16 %v60
    %v149 = vunpack.c.l.b16 %v61
    %v150 = vunpack.c.l.b16 %v62
    %v151 = vunpack.c.l.b16 %v63
    %v152 = vpack.c.b16 %v149, %v148
    %v153 = vpack.c.b16 %v151, %v150
    %vm156 = vcmask 261120
    %v158 = vsel %vm156, %v128, 0
    %v161 = vsel %vm156, %v129, 0
    %v164 = vsel %vm156, %v130, 0
    %v167 = vsel %vm156, %v131, 0
    %v170 = vsel %vm156, %v132, 0
    %v173 = vsel %vm156, %v133, 0
    %v176 = vsel %vm156, %v134, 0
    %v179 = vsel %vm156, %v135, 0
    %v182 = vsel %vm156, %v136, 0
    %v185 = vsel %vm156, %v137, 0
    %v188 = vsel %vm156, %v138, 0
    %v191 = vsel %vm156, %v139, 0
    %v194 = vsel %vm156, %v140, 0
    %v197 = vsel %vm156, %v141, 0
    %v200 = vsel %vm156, %v142, 0
    %v203 = vsel %vm156, %v143, 0
    %205 = vmatprep.subr.bf16.mxu0 0
    %206 = vmatpush1.bf16.msra.mxu0 0
    %207 = vmatprep.subr.bf16.mxu0 0
    %208 = vmatpush1.bf16.msra.mxu0 0
    %209 = vmatprep.subr.bf16.mxu0 0
    %210 = vmatpush1.bf16.msra.mxu0 0
    %211 = vmatprep.subr.bf16.mxu0 0
    %212 = vmatpush1.bf16.msra.mxu0 0
    %213 = vmatprep.subr.bf16.mxu0 0
    %214 = vmatpush1.bf16.msra.mxu0 0
    %215 = vmatprep.subr.bf16.mxu0 0
    %216 = vmatpush1.bf16.msra.mxu0 0
    %217 = vmatprep.subr.bf16.mxu0 0
    %218 = vmatpush1.bf16.msra.mxu0 %v153
    %219 = vmatprep.subr.bf16.mxu0 0
    %220 = vmatpush1.bf16.msra.mxu0 %v152
    %221 = vmatprep.subr.bf16.mxu0 0
    %222 = vmatpush2.bf16.msra.mxu0 0
    %223 = vmatprep.subr.bf16.mxu0 0
    %224 = vmatpush2.bf16.msra.mxu0 0
    %225 = vmatprep.subr.bf16.mxu0 0
    %226 = vmatpush2.bf16.msra.mxu0 0
    %227 = vmatprep.subr.bf16.mxu0 0
    %228 = vmatpush2.bf16.msra.mxu0 0
    %229 = vmatprep.subr.bf16.mxu0 0
    %230 = vmatpush2.bf16.msra.mxu0 0
    %231 = vmatprep.subr.bf16.mxu0 0
    %232 = vmatpush2.bf16.msra.mxu0 0
    %233 = vmatprep.subr.bf16.mxu0 0
    %234 = vmatpush2.bf16.msra.mxu0 0
    %235 = vmatprep.subr.bf16.mxu0 0
    %236 = vmatpush2.bf16.msra.mxu0 0
    %237 = vmatprep.mubr.bf16.mxu0 0
    %238 = vmatmul.mubr.bf16.gmra.mxu0 %v158
    %v239 = vpop.f32.mrf.mxu0
    %v240 = vadd.f32 0.0, %v239
    %v241 = vpop.f32.mrf.mxu0
    %v242 = vpop.f32.mrf.mxu0
    %v243 = vadd.f32 0.0, %v242
    %v244 = vpop.f32.mrf.mxu0
    %245 = vmatprep.mubr.bf16.mxu0 0
    %246 = vmatmul.mubr.bf16.gmra.mxu0 %v161
    %v247 = vpop.f32.mrf.mxu0
    %v248 = vadd.f32 0.0, %v247
    %v249 = vpop.f32.mrf.mxu0
    %v250 = vpop.f32.mrf.mxu0
    %v251 = vadd.f32 0.0, %v250
    %v252 = vpop.f32.mrf.mxu0
    %253 = vmatprep.mubr.bf16.mxu0 0
    %254 = vmatmul.mubr.bf16.gmra.mxu0 %v164
    %v255 = vpop.f32.mrf.mxu0
    %v256 = vadd.f32 0.0, %v255
    %v257 = vpop.f32.mrf.mxu0
    %v258 = vpop.f32.mrf.mxu0
    %v259 = vadd.f32 0.0, %v258
    %v260 = vpop.f32.mrf.mxu0
    %261 = vmatprep.mubr.bf16.mxu0 0
    %262 = vmatmul.mubr.bf16.gmra.mxu0 %v167
    %v263 = vpop.f32.mrf.mxu0
    %v264 = vadd.f32 0.0, %v263
    %v265 = vpop.f32.mrf.mxu0
    %v266 = vpop.f32.mrf.mxu0
    %v267 = vadd.f32 0.0, %v266
    %v268 = vpop.f32.mrf.mxu0
    %269 = vmatprep.mubr.bf16.mxu0 0
    %270 = vmatmul.mubr.bf16.gmra.mxu0 %v170
    %v271 = vpop.f32.mrf.mxu0
    %v272 = vadd.f32 0.0, %v271
    %v273 = vpop.f32.mrf.mxu0
    %v274 = vpop.f32.mrf.mxu0
    %v275 = vadd.f32 0.0, %v274
    %v276 = vpop.f32.mrf.mxu0
    %277 = vmatprep.mubr.bf16.mxu0 0
    %278 = vmatmul.mubr.bf16.gmra.mxu0 %v173
    %v279 = vpop.f32.mrf.mxu0
    %v280 = vadd.f32 0.0, %v279
    %v281 = vpop.f32.mrf.mxu0
    %v282 = vpop.f32.mrf.mxu0
    %v283 = vadd.f32 0.0, %v282
    %v284 = vpop.f32.mrf.mxu0
    %285 = vmatprep.mubr.bf16.mxu0 0
    %286 = vmatmul.mubr.bf16.gmra.mxu0 %v176
    %v287 = vpop.f32.mrf.mxu0
    %v288 = vadd.f32 0.0, %v287
    %v289 = vpop.f32.mrf.mxu0
    %v290 = vpop.f32.mrf.mxu0
    %v291 = vadd.f32 0.0, %v290
    %v292 = vpop.f32.mrf.mxu0
    %293 = vmatprep.mubr.bf16.mxu0 0
    %294 = vmatmul.mubr.bf16.gmra.mxu0 %v179
    %v295 = vpop.f32.mrf.mxu0
    %v296 = vadd.f32 0.0, %v295
    %v297 = vpop.f32.mrf.mxu0
    %v298 = vpop.f32.mrf.mxu0
    %v299 = vadd.f32 0.0, %v298
    %v300 = vpop.f32.mrf.mxu0
    %301 = vmatprep.mubr.bf16.mxu0 0
    %302 = vmatmul.mubr.bf16.gmra.mxu0 %v182
    %v303 = vpop.f32.mrf.mxu0
    %v304 = vadd.f32 0.0, %v303
    %v305 = vpop.f32.mrf.mxu0
    %v306 = vpop.f32.mrf.mxu0
    %v307 = vadd.f32 0.0, %v306
    %v308 = vpop.f32.mrf.mxu0
    %309 = vmatprep.mubr.bf16.mxu0 0
    %310 = vmatmul.mubr.bf16.gmra.mxu0 %v185
    %v311 = vpop.f32.mrf.mxu0
    %v312 = vadd.f32 0.0, %v311
    %v313 = vpop.f32.mrf.mxu0
    %v314 = vpop.f32.mrf.mxu0
    %v315 = vadd.f32 0.0, %v314
    %v316 = vpop.f32.mrf.mxu0
    %317 = vmatprep.mubr.bf16.mxu0 0
    %318 = vmatmul.mubr.bf16.gmra.mxu0 %v188
    %v319 = vpop.f32.mrf.mxu0
    %v320 = vadd.f32 0.0, %v319
    %v321 = vpop.f32.mrf.mxu0
    %v322 = vpop.f32.mrf.mxu0
    %v323 = vadd.f32 0.0, %v322
    %v324 = vpop.f32.mrf.mxu0
    %325 = vmatprep.mubr.bf16.mxu0 0
    %326 = vmatmul.mubr.bf16.gmra.mxu0 %v191
    %v327 = vpop.f32.mrf.mxu0
    %v328 = vadd.f32 0.0, %v327
    %v329 = vpop.f32.mrf.mxu0
    %v330 = vpop.f32.mrf.mxu0
    %v331 = vadd.f32 0.0, %v330
    %v332 = vpop.f32.mrf.mxu0
    %333 = vmatprep.mubr.bf16.mxu0 0
    %334 = vmatmul.mubr.bf16.gmra.mxu0 %v194
    %v335 = vpop.f32.mrf.mxu0
    %v336 = vadd.f32 0.0, %v335
    %v337 = vpop.f32.mrf.mxu0
    %v338 = vpop.f32.mrf.mxu0
    %v339 = vadd.f32 0.0, %v338
    %v340 = vpop.f32.mrf.mxu0
    %341 = vmatprep.mubr.bf16.mxu0 0
    %342 = vmatmul.mubr.bf16.gmra.mxu0 %v197
    %v343 = vpop.f32.mrf.mxu0
    %v344 = vadd.f32 0.0, %v343
    %v345 = vpop.f32.mrf.mxu0
    %v346 = vpop.f32.mrf.mxu0
    %v347 = vadd.f32 0.0, %v346
    %v348 = vpop.f32.mrf.mxu0
    %349 = vmatprep.mubr.bf16.mxu0 0
    %350 = vmatmul.mubr.bf16.gmra.mxu0 %v200
    %v351 = vpop.f32.mrf.mxu0
    %v352 = vadd.f32 0.0, %v351
    %v353 = vpop.f32.mrf.mxu0
    %v354 = vpop.f32.mrf.mxu0
    %v355 = vadd.f32 0.0, %v354
    %v356 = vpop.f32.mrf.mxu0
    %357 = vmatprep.mubr.bf16.mxu0 0
    %358 = vmatmul.mubr.bf16.gmra.mxu0 %v203
    %v359 = vpop.f32.mrf.mxu0
    %v360 = vadd.f32 0.0, %v359
    %v361 = vpop.f32.mrf.mxu0
    %v362 = vpop.f32.mrf.mxu0
    %v363 = vadd.f32 0.0, %v362
    %v364 = vpop.f32.mrf.mxu0
    %365 = vdwg.mxu0
    %v366 = vld [vmem:[%s1] sm:$0x1]
    %v367 = vld [vmem:[%s3] sm:$0xf]
    %v368 = vld [vmem:[%s3 + $0x4] sm:$0xf]
    %v369 = vld [vmem:[%s3 + $0x8] sm:$0xf]
    %v370 = vld [vmem:[%s3 + $0xc] sm:$0xf]
    %v371 = vld [vmem:[%s4] sm:$0x1]
    %v373 = vlaneseq
    %v374 = vshrl.u32 %v373, 7
    %v375 = vsub.s32 0, %v374
    %v376 = vrot.slane %v371, %v375
    %v382 = vunpack.c.l.b16 %v367
    %v383 = vunpack.c.l.b16 %v368
    %v384 = vunpack.c.l.b16 %v369
    %v385 = vunpack.c.l.b16 %v370
    %v386 = vpack.c.b16 %v383, %v382
    %v387 = vpack.c.b16 %v385, %v384
    %v391 = vsel %vm156, %v366, 0
    %393 = vmatprep.subr.bf16.mxu0 0
    %394 = vmatpush1.bf16.msra.mxu0 0
    %395 = vmatprep.subr.bf16.mxu0 0
    %396 = vmatpush1.bf16.msra.mxu0 0
    %397 = vmatprep.subr.bf16.mxu0 0
    %398 = vmatpush1.bf16.msra.mxu0 0
    %399 = vmatprep.subr.bf16.mxu0 0
    %400 = vmatpush1.bf16.msra.mxu0 0
    %401 = vmatprep.subr.bf16.mxu0 0
    %402 = vmatpush1.bf16.msra.mxu0 0
    %403 = vmatprep.subr.bf16.mxu0 0
    %404 = vmatpush1.bf16.msra.mxu0 0
    %405 = vmatprep.subr.bf16.mxu0 0
    %406 = vmatpush1.bf16.msra.mxu0 %v387
    %407 = vmatprep.subr.bf16.mxu0 0
    %408 = vmatpush1.bf16.msra.mxu0 %v386
    %409 = vmatprep.subr.bf16.mxu0 0
    %410 = vmatpush2.bf16.msra.mxu0 0
    %411 = vmatprep.subr.bf16.mxu0 0
    %412 = vmatpush2.bf16.msra.mxu0 0
    %413 = vmatprep.subr.bf16.mxu0 0
    %414 = vmatpush2.bf16.msra.mxu0 0
    %415 = vmatprep.subr.bf16.mxu0 0
    %416 = vmatpush2.bf16.msra.mxu0 0
    %417 = vmatprep.subr.bf16.mxu0 0
    %418 = vmatpush2.bf16.msra.mxu0 0
    %419 = vmatprep.subr.bf16.mxu0 0
    %420 = vmatpush2.bf16.msra.mxu0 0
    %421 = vmatprep.subr.bf16.mxu0 0
    %422 = vmatpush2.bf16.msra.mxu0 0
    %423 = vmatprep.subr.bf16.mxu0 0
    %424 = vmatpush2.bf16.msra.mxu0 0
    %425 = vmatprep.mubr.bf16.mxu0 0
    %426 = vmatmul.mubr.bf16.gmra.mxu0 %v391
    %v427 = vpop.f32.mrf.mxu0
    %v428 = vadd.f32 %v376, %v427
    %v429 = vpop.f32.mrf.mxu0
    %v430 = vpop.f32.mrf.mxu0
    %v431 = vpop.f32.mrf.mxu0
    %432 = vdwg.mxu0
    %v435 = vunpack.c.l.s4 1966171168
    %v436 = vunpack.c.0.s8 %v435
    %v437 = vlaneseq
    %v438 = vshrl.u32 %v437, 7
    %v439 = vsub.s32 %v436, %v438
    %v440 = vrot.slane %v428, %v439
    %v441 = vcombine.high %v440, %v440
    %v443 = vunpack.c.l.s4 1966171168
    %v444 = vunpack.c.0.s8 %v443
    %v445 = vlaneseq
    %v446 = vshrl.u32 %v445, 7
    %v447 = vsub.s32 %v444, %v446
    %v448 = vrot.slane %v440, %v447
    %v450 = vunpack.c.l.s4 1966171168
    %v451 = vunpack.c.0.s8 %v450
    %v452 = vlaneseq
    %v453 = vshrl.u32 %v452, 7
    %v454 = vsub.s32 %v451, %v453
    %v455 = vrot.slane %v441, %v454
    %v456 = vlaneseq
    %v457 = vshrl.u32 %v456, 7
    %v458 = vsub.s32 0, %v457
    %v459 = vrot.slane %v448, %v458
    %v460 = vlaneseq
    %v461 = vshrl.u32 %v460, 7
    %v462 = vsub.s32 0, %v461
    %v463 = vrot.slane %v455, %v462
    %v466 = vadd.f32 %v240, %v459
    %v467 = vadd.f32 %v243, %v459
    %v468 = vadd.f32 %v248, %v459
    %v469 = vadd.f32 %v251, %v459
    %v470 = vadd.f32 %v256, %v459
    %v471 = vadd.f32 %v259, %v459
    %v472 = vadd.f32 %v264, %v459
    %v473 = vadd.f32 %v267, %v459
    %v474 = vadd.f32 %v272, %v459
    %v475 = vadd.f32 %v275, %v459
    %v476 = vadd.f32 %v280, %v459
    %v477 = vadd.f32 %v283, %v459
    %v478 = vadd.f32 %v288, %v459
    %v479 = vadd.f32 %v291, %v459
    %v480 = vadd.f32 %v296, %v459
    %v481 = vadd.f32 %v299, %v459
    %v482 = vadd.f32 %v304, %v463
    %v483 = vadd.f32 %v307, %v463
    %v484 = vadd.f32 %v312, %v463
    %v485 = vadd.f32 %v315, %v463
    %v486 = vadd.f32 %v320, %v463
    %v487 = vadd.f32 %v323, %v463
    %v488 = vadd.f32 %v328, %v463
    %v489 = vadd.f32 %v331, %v463
    %v490 = vadd.f32 %v336, %v463
    %v491 = vadd.f32 %v339, %v463
    %v492 = vadd.f32 %v344, %v463
    %v493 = vadd.f32 %v347, %v463
    %v494 = vadd.f32 %v352, %v463
    %v495 = vadd.f32 %v355, %v463
    %v496 = vadd.f32 %v360, %v463
    %v497 = vadd.f32 %v363, %v463
    %v498 = vmax.f32 %v466, 0.0
    %v499 = vmax.f32 %v467, 0.0
    %v500 = vmax.f32 %v468, 0.0
    %v501 = vmax.f32 %v469, 0.0
    %v502 = vmax.f32 %v470, 0.0
    %v503 = vmax.f32 %v471, 0.0
    %v504 = vmax.f32 %v472, 0.0
    %v505 = vmax.f32 %v473, 0.0
    %v506 = vmax.f32 %v474, 0.0
    %v507 = vmax.f32 %v475, 0.0
    %v508 = vmax.f32 %v476, 0.0
    %v509 = vmax.f32 %v477, 0.0
    %v510 = vmax.f32 %v478, 0.0
    %v511 = vmax.f32 %v479, 0.0
    %v512 = vmax.f32 %v480, 0.0
    %v513 = vmax.f32 %v481, 0.0
    %v514 = vmax.f32 %v482, 0.0
    %v515 = vmax.f32 %v483, 0.0
    %v516 = vmax.f32 %v484, 0.0
    %v517 = vmax.f32 %v485, 0.0
    %v518 = vmax.f32 %v486, 0.0
    %v519 = vmax.f32 %v487, 0.0
    %v520 = vmax.f32 %v488, 0.0
    %v521 = vmax.f32 %v489, 0.0
    %v522 = vmax.f32 %v490, 0.0
    %v523 = vmax.f32 %v491, 0.0
    %v524 = vmax.f32 %v492, 0.0
    %v525 = vmax.f32 %v493, 0.0
    %v526 = vmax.f32 %v494, 0.0
    %v527 = vmax.f32 %v495, 0.0
    %v528 = vmax.f32 %v496, 0.0
    %v529 = vmax.f32 %v497, 0.0
    %v530 = vld [vmem:[%s5] sm:$0x1]
    %v532 = vlaneseq
    %v533 = vshrl.u32 %v532, 7
    %v534 = vsub.s32 0, %v533
    %v535 = vrot.slane %v530, %v534
    %v537 = vmul.f32 %v498, %v535
    %v538 = vmul.f32 %v499, %v535
    %v539 = vmul.f32 %v500, %v535
    %v540 = vmul.f32 %v501, %v535
    %v541 = vmul.f32 %v502, %v535
    %v542 = vmul.f32 %v503, %v535
    %v543 = vmul.f32 %v504, %v535
    %v544 = vmul.f32 %v505, %v535
    %v545 = vmul.f32 %v506, %v535
    %v546 = vmul.f32 %v507, %v535
    %v547 = vmul.f32 %v508, %v535
    %v548 = vmul.f32 %v509, %v535
    %v549 = vmul.f32 %v510, %v535
    %v550 = vmul.f32 %v511, %v535
    %v551 = vmul.f32 %v512, %v535
    %v552 = vmul.f32 %v513, %v535
    %v553 = vmul.f32 %v514, %v535
    %v554 = vmul.f32 %v515, %v535
    %v555 = vmul.f32 %v516, %v535
    %v556 = vmul.f32 %v517, %v535
    %v557 = vmul.f32 %v518, %v535
    %v558 = vmul.f32 %v519, %v535
    %v559 = vmul.f32 %v520, %v535
    %v560 = vmul.f32 %v521, %v535
    %v561 = vmul.f32 %v522, %v535
    %v562 = vmul.f32 %v523, %v535
    %v563 = vmul.f32 %v524, %v535
    %v564 = vmul.f32 %v525, %v535
    %v565 = vmul.f32 %v526, %v535
    %v566 = vmul.f32 %v527, %v535
    %v567 = vmul.f32 %v528, %v535
    %v568 = vmul.f32 %v529, %v535
    %v569 = vsel %vm156, %v537, 0.0
    %570 = vadd.xlane.f32.xlu0 %v569
    %v571 = vpop.xlane.xlu0 %570
    %v572 = vsel %vm156, %v538, 0.0
    %573 = vadd.xlane.f32.xlu0 %v572
    %v574 = vpop.xlane.xlu0 %573
    %v575 = vsel %vm156, %v539, 0.0
    %576 = vadd.xlane.f32.xlu0 %v575
    %v577 = vpop.xlane.xlu0 %576
    %v578 = vsel %vm156, %v540, 0.0
    %579 = vadd.xlane.f32.xlu0 %v578
    %v580 = vpop.xlane.xlu0 %579
    %v581 = vsel %vm156, %v541, 0.0
    %582 = vadd.xlane.f32.xlu0 %v581
    %v583 = vpop.xlane.xlu0 %582
    %v584 = vsel %vm156, %v542, 0.0
    %585 = vadd.xlane.f32.xlu0 %v584
    %v586 = vpop.xlane.xlu0 %585
    %v587 = vsel %vm156, %v543, 0.0
    %588 = vadd.xlane.f32.xlu0 %v587
    %v589 = vpop.xlane.xlu0 %588
    %v590 = vsel %vm156, %v544, 0.0
    %591 = vadd.xlane.f32.xlu0 %v590
    %v592 = vpop.xlane.xlu0 %591
    %v593 = vsel %vm156, %v545, 0.0
    %594 = vadd.xlane.f32.xlu0 %v593
    %v595 = vpop.xlane.xlu0 %594
    %v596 = vsel %vm156, %v546, 0.0
    %597 = vadd.xlane.f32.xlu0 %v596
    %v598 = vpop.xlane.xlu0 %597
    %v599 = vsel %vm156, %v547, 0.0
    %600 = vadd.xlane.f32.xlu0 %v599
    %v601 = vpop.xlane.xlu0 %600
    %v602 = vsel %vm156, %v548, 0.0
    %603 = vadd.xlane.f32.xlu0 %v602
    %v604 = vpop.xlane.xlu0 %603
    %v605 = vsel %vm156, %v549, 0.0
    %606 = vadd.xlane.f32.xlu0 %v605
    %v607 = vpop.xlane.xlu0 %606
    %v608 = vsel %vm156, %v550, 0.0
    %609 = vadd.xlane.f32.xlu0 %v608
    %v610 = vpop.xlane.xlu0 %609
    %v611 = vsel %vm156, %v551, 0.0
    %612 = vadd.xlane.f32.xlu0 %v611
    %v613 = vpop.xlane.xlu0 %612
    %v614 = vsel %vm156, %v552, 0.0
    %615 = vadd.xlane.f32.xlu0 %v614
    %v616 = vpop.xlane.xlu0 %615
    %v617 = vsel %vm156, %v553, 0.0
    %618 = vadd.xlane.f32.xlu0 %v617
    %v619 = vpop.xlane.xlu0 %618
    %v620 = vsel %vm156, %v554, 0.0
    %621 = vadd.xlane.f32.xlu0 %v620
    %v622 = vpop.xlane.xlu0 %621
    %v623 = vsel %vm156, %v555, 0.0
    %624 = vadd.xlane.f32.xlu0 %v623
    %v625 = vpop.xlane.xlu0 %624
    %v626 = vsel %vm156, %v556, 0.0
    %627 = vadd.xlane.f32.xlu0 %v626
    %v628 = vpop.xlane.xlu0 %627
    %v629 = vsel %vm156, %v557, 0.0
    %630 = vadd.xlane.f32.xlu0 %v629
    %v631 = vpop.xlane.xlu0 %630
    %v632 = vsel %vm156, %v558, 0.0
    %633 = vadd.xlane.f32.xlu0 %v632
    %v634 = vpop.xlane.xlu0 %633
    %v635 = vsel %vm156, %v559, 0.0
    %636 = vadd.xlane.f32.xlu0 %v635
    %v637 = vpop.xlane.xlu0 %636
    %v638 = vsel %vm156, %v560, 0.0
    %639 = vadd.xlane.f32.xlu0 %v638
    %v640 = vpop.xlane.xlu0 %639
    %v641 = vsel %vm156, %v561, 0.0
    %642 = vadd.xlane.f32.xlu0 %v641
    %v643 = vpop.xlane.xlu0 %642
    %v644 = vsel %vm156, %v562, 0.0
    %645 = vadd.xlane.f32.xlu0 %v644
    %v646 = vpop.xlane.xlu0 %645
    %v647 = vsel %vm156, %v563, 0.0
    %648 = vadd.xlane.f32.xlu0 %v647
    %v649 = vpop.xlane.xlu0 %648
    %v650 = vsel %vm156, %v564, 0.0
    %651 = vadd.xlane.f32.xlu0 %v650
    %v652 = vpop.xlane.xlu0 %651
    %v653 = vsel %vm156, %v565, 0.0
    %654 = vadd.xlane.f32.xlu0 %v653
    %v655 = vpop.xlane.xlu0 %654
    %v656 = vsel %vm156, %v566, 0.0
    %657 = vadd.xlane.f32.xlu0 %v656
    %v658 = vpop.xlane.xlu0 %657
    %v659 = vsel %vm156, %v567, 0.0
    %660 = vadd.xlane.f32.xlu0 %v659
    %v661 = vpop.xlane.xlu0 %660
    %v662 = vsel %vm156, %v568, 0.0
    %663 = vadd.xlane.f32.xlu0 %v662
    %v664 = vpop.xlane.xlu0 %663
    %v665 = vlaneseq
    %v666 = vand.u32 %v665, 127
    %vm667 = vcmp.lt.s32.totalorder %v666, 8
    %v700 = vlaneseq
    %v701 = vshrl.u32 %v700, 7
    %v702 = vsub.s32 %v666, %v701
    %v703 = vrot.slane %v571, %v702
    %v704 = vadd.s32 %v666, 4294967288
    %v705 = vlaneseq
    %v706 = vshrl.u32 %v705, 7
    %v707 = vsub.s32 %v704, %v706
    %v708 = vrot.slane %v574, %v707
    %vm709 = vcmask 130112
    %v710 = vsel %vm709, %v708, %v703
    %v711 = vadd.s32 %v666, 4294967280
    %v712 = vlaneseq
    %v713 = vshrl.u32 %v712, 7
    %v714 = vsub.s32 %v711, %v713
    %v715 = vrot.slane %v577, %v714
    %vm716 = vcmask 195712
    %v717 = vsel %vm716, %v715, %v710
    %v718 = vadd.s32 %v666, 4294967272
    %v719 = vlaneseq
    %v720 = vshrl.u32 %v719, 7
    %v721 = vsub.s32 %v718, %v720
    %v722 = vrot.slane %v580, %v721
    %vm723 = vcmask 261312
    %v724 = vsel %vm723, %v722, %v717
    %v725 = vadd.s32 %v666, 4294967264
    %v726 = vlaneseq
    %v727 = vshrl.u32 %v726, 7
    %v728 = vsub.s32 %v725, %v727
    %v729 = vrot.slane %v583, %v728
    %vm730 = vcmask 326912
    %v731 = vsel %vm730, %v729, %v724
    %v732 = vadd.s32 %v666, 4294967256
    %v733 = vlaneseq
    %v734 = vshrl.u32 %v733, 7
    %v735 = vsub.s32 %v732, %v734
    %v736 = vrot.slane %v586, %v735
    %vm737 = vcmask 392512
    %v738 = vsel %vm737, %v736, %v731
    %v739 = vadd.s32 %v666, 4294967248
    %v740 = vlaneseq
    %v741 = vshrl.u32 %v740, 7
    %v742 = vsub.s32 %v739, %v741
    %v743 = vrot.slane %v589, %v742
    %vm744 = vcmask 458112
    %v745 = vsel %vm744, %v743, %v738
    %v746 = vadd.s32 %v666, 4294967240
    %v747 = vlaneseq
    %v748 = vshrl.u32 %v747, 7
    %v749 = vsub.s32 %v746, %v748
    %v750 = vrot.slane %v592, %v749
    %vm751 = vcmask 523712
    %v752 = vsel %vm751, %v750, %v745
    %v753 = vadd.s32 %v666, 4294967232
    %v754 = vlaneseq
    %v755 = vshrl.u32 %v754, 7
    %v756 = vsub.s32 %v753, %v755
    %v757 = vrot.slane %v595, %v756
    %vm758 = vcmask 589312
    %v759 = vsel %vm758, %v757, %v752
    %v760 = vadd.s32 %v666, 4294967224
    %v761 = vlaneseq
    %v762 = vshrl.u32 %v761, 7
    %v763 = vsub.s32 %v760, %v762
    %v764 = vrot.slane %v598, %v763
    %vm765 = vcmask 654912
    %v766 = vsel %vm765, %v764, %v759
    %v767 = vadd.s32 %v666, 4294967216
    %v768 = vlaneseq
    %v769 = vshrl.u32 %v768, 7
    %v770 = vsub.s32 %v767, %v769
    %v771 = vrot.slane %v601, %v770
    %vm772 = vcmask 720512
    %v773 = vsel %vm772, %v771, %v766
    %v774 = vadd.s32 %v666, 4294967208
    %v775 = vlaneseq
    %v776 = vshrl.u32 %v775, 7
    %v777 = vsub.s32 %v774, %v776
    %v778 = vrot.slane %v604, %v777
    %vm779 = vcmask 786112
    %v780 = vsel %vm779, %v778, %v773
    %v781 = vadd.s32 %v666, 4294967200
    %v782 = vlaneseq
    %v783 = vshrl.u32 %v782, 7
    %v784 = vsub.s32 %v781, %v783
    %v785 = vrot.slane %v607, %v784
    %vm786 = vcmask 851712
    %v787 = vsel %vm786, %v785, %v780
    %v788 = vadd.s32 %v666, 4294967192
    %v789 = vlaneseq
    %v790 = vshrl.u32 %v789, 7
    %v791 = vsub.s32 %v788, %v790
    %v792 = vrot.slane %v610, %v791
    %vm793 = vcmask 917312
    %v794 = vsel %vm793, %v792, %v787
    %v795 = vadd.s32 %v666, 4294967184
    %v796 = vlaneseq
    %v797 = vshrl.u32 %v796, 7
    %v798 = vsub.s32 %v795, %v797
    %v799 = vrot.slane %v613, %v798
    %vm800 = vcmask 982912
    %v801 = vsel %vm800, %v799, %v794
    %v802 = vadd.s32 %v666, 4294967176
    %v803 = vlaneseq
    %v804 = vshrl.u32 %v803, 7
    %v805 = vsub.s32 %v802, %v804
    %v806 = vrot.slane %v616, %v805
    %vm807 = vcmask 1048512
    %v808 = vsel %vm807, %v806, %v801
    %v809 = vlaneseq
    %v810 = vshrl.u32 %v809, 7
    %v811 = vsub.s32 %v666, %v810
    %v812 = vrot.slane %v619, %v811
    %v813 = vlaneseq
    %v814 = vshrl.u32 %v813, 7
    %v815 = vsub.s32 %v704, %v814
    %v816 = vrot.slane %v622, %v815
    %v817 = vsel %vm709, %v816, %v812
    %v818 = vlaneseq
    %v819 = vshrl.u32 %v818, 7
    %v820 = vsub.s32 %v711, %v819
    %v821 = vrot.slane %v625, %v820
    %v822 = vsel %vm716, %v821, %v817
    %v823 = vlaneseq
    %v824 = vshrl.u32 %v823, 7
    %v825 = vsub.s32 %v718, %v824
    %v826 = vrot.slane %v628, %v825
    %v827 = vsel %vm723, %v826, %v822
    %v828 = vlaneseq
    %v829 = vshrl.u32 %v828, 7
    %v830 = vsub.s32 %v725, %v829
    %v831 = vrot.slane %v631, %v830
    %v832 = vsel %vm730, %v831, %v827
    %v833 = vlaneseq
    %v834 = vshrl.u32 %v833, 7
    %v835 = vsub.s32 %v732, %v834
    %v836 = vrot.slane %v634, %v835
    %v837 = vsel %vm737, %v836, %v832
    %v838 = vlaneseq
    %v839 = vshrl.u32 %v838, 7
    %v840 = vsub.s32 %v739, %v839
    %v841 = vrot.slane %v637, %v840
    %v842 = vsel %vm744, %v841, %v837
    %v843 = vlaneseq
    %v844 = vshrl.u32 %v843, 7
    %v845 = vsub.s32 %v746, %v844
    %v846 = vrot.slane %v640, %v845
    %v847 = vsel %vm751, %v846, %v842
    %v848 = vlaneseq
    %v849 = vshrl.u32 %v848, 7
    %v850 = vsub.s32 %v753, %v849
    %v851 = vrot.slane %v643, %v850
    %v852 = vsel %vm758, %v851, %v847
    %v853 = vlaneseq
    %v854 = vshrl.u32 %v853, 7
    %v855 = vsub.s32 %v760, %v854
    %v856 = vrot.slane %v646, %v855
    %v857 = vsel %vm765, %v856, %v852
    %v858 = vlaneseq
    %v859 = vshrl.u32 %v858, 7
    %v860 = vsub.s32 %v767, %v859
    %v861 = vrot.slane %v649, %v860
    %v862 = vsel %vm772, %v861, %v857
    %v863 = vlaneseq
    %v864 = vshrl.u32 %v863, 7
    %v865 = vsub.s32 %v774, %v864
    %v866 = vrot.slane %v652, %v865
    %v867 = vsel %vm779, %v866, %v862
    %v868 = vlaneseq
    %v869 = vshrl.u32 %v868, 7
    %v870 = vsub.s32 %v781, %v869
    %v871 = vrot.slane %v655, %v870
    %v872 = vsel %vm786, %v871, %v867
    %v873 = vlaneseq
    %v874 = vshrl.u32 %v873, 7
    %v875 = vsub.s32 %v788, %v874
    %v876 = vrot.slane %v658, %v875
    %v877 = vsel %vm793, %v876, %v872
    %v878 = vlaneseq
    %v879 = vshrl.u32 %v878, 7
    %v880 = vsub.s32 %v795, %v879
    %v881 = vrot.slane %v661, %v880
    %v882 = vsel %vm800, %v881, %v877
    %v883 = vlaneseq
    %v884 = vshrl.u32 %v883, 7
    %v885 = vsub.s32 %v802, %v884
    %v886 = vrot.slane %v664, %v885
    %v887 = vsel %vm807, %v886, %v882
    %vm888 = vcmask 1041409
    %v889 = vsel %vm888, %v887, %v808
    %v891 = vsel %vm667, %v889, -1e+30
    %vm892 = vcmask 1041408
    %v893 = vsel %vm892, %v891, -inf
    %894 = vmax.xlane.f32.xlu0 %v893
    %v895 = vpop.xlane.xlu0 %894
    %v896 = vsub.f32 %v891, %v895
    %v897 = vmul.f32 %v896, 1.442695
    %v898 = vpow.pop %v897
    %v899 = vsel %vm892, %v898, 0.0
    %900 = vadd.xlane.f32.xlu0 %v899
    %v901 = vpop.xlane.xlu0 %900
    %v902 = vrcp.pop %v901
    %v903 = vmul.f32 %v898, %v902
    %v906 = vunpack.c.l.s4 1966171168
    %v907 = vunpack.c.0.s8 %v906
    %v908 = vlaneseq
    %v909 = vshrl.u32 %v908, 7
    %v910 = vsub.s32 %v907, %v909
    %v911 = vrot.slane %v903, %v910
    %v912 = vcombine.high %v911, %v911
    %v914 = vunpack.c.l.s4 1966171168
    %v915 = vunpack.c.0.s8 %v914
    %v916 = vlaneseq
    %v917 = vshrl.u32 %v916, 7
    %v918 = vsub.s32 %v915, %v917
    %v919 = vrot.slane %v911, %v918
    %v921 = vunpack.c.l.s4 1966171168
    %v922 = vunpack.c.0.s8 %v921
    %v923 = vlaneseq
    %v924 = vshrl.u32 %v923, 7
    %v925 = vsub.s32 %v922, %v924
    %v926 = vrot.slane %v912, %v925
    %v929 = vpack.c.bf16 %v919, %v919
    %v930 = vpack.c.bf16 %v926, %v926
    %939 = vmatprep.subr.bf16.mxu0 0
    %940 = vmatpush1.bf16.msra.mxu0 %v135
    %941 = vmatprep.subr.bf16.mxu0 0
    %942 = vmatpush1.bf16.msra.mxu0 %v134
    %943 = vmatprep.subr.bf16.mxu0 0
    %944 = vmatpush1.bf16.msra.mxu0 %v133
    %945 = vmatprep.subr.bf16.mxu0 0
    %946 = vmatpush1.bf16.msra.mxu0 %v132
    %947 = vmatprep.subr.bf16.mxu0 0
    %948 = vmatpush1.bf16.msra.mxu0 %v131
    %949 = vmatprep.subr.bf16.mxu0 0
    %950 = vmatpush1.bf16.msra.mxu0 %v130
    %951 = vmatprep.subr.bf16.mxu0 0
    %952 = vmatpush1.bf16.msra.mxu0 %v129
    %953 = vmatprep.subr.bf16.mxu0 0
    %954 = vmatpush1.bf16.msra.mxu0 %v128
    %955 = vmatprep.subr.bf16.mxu0 0
    %956 = vmatpush2.bf16.msra.mxu0 0
    %957 = vmatprep.subr.bf16.mxu0 0
    %958 = vmatpush2.bf16.msra.mxu0 0
    %959 = vmatprep.subr.bf16.mxu0 0
    %960 = vmatpush2.bf16.msra.mxu0 0
    %961 = vmatprep.subr.bf16.mxu0 0
    %962 = vmatpush2.bf16.msra.mxu0 0
    %963 = vmatprep.subr.bf16.mxu0 0
    %964 = vmatpush2.bf16.msra.mxu0 0
    %965 = vmatprep.subr.bf16.mxu0 0
    %966 = vmatpush2.bf16.msra.mxu0 0
    %967 = vmatprep.subr.bf16.mxu0 0
    %968 = vmatpush2.bf16.msra.mxu0 0
    %969 = vmatprep.subr.bf16.mxu0 0
    %970 = vmatpush2.bf16.msra.mxu0 0
    %971 = vmatprep.mubr.bf16.mxu0 0
    %972 = vmatmul.mubr.bf16.gmra.mxu0 %v929
    %v973 = vpop.f32.mrf.mxu0
    %v974 = vadd.f32 0.0, %v973
    %v975 = vpop.f32.mrf.mxu0
    %v976 = vpop.f32.mrf.mxu0
    %v977 = vpop.f32.mrf.mxu0
    %978 = vdwg.mxu0
    %987 = vmatprep.subr.bf16.mxu0 0
    %988 = vmatpush1.bf16.msra.mxu0 %v143
    %989 = vmatprep.subr.bf16.mxu0 0
    %990 = vmatpush1.bf16.msra.mxu0 %v142
    %991 = vmatprep.subr.bf16.mxu0 0
    %992 = vmatpush1.bf16.msra.mxu0 %v141
    %993 = vmatprep.subr.bf16.mxu0 0
    %994 = vmatpush1.bf16.msra.mxu0 %v140
    %995 = vmatprep.subr.bf16.mxu0 0
    %996 = vmatpush1.bf16.msra.mxu0 %v139
    %997 = vmatprep.subr.bf16.mxu0 0
    %998 = vmatpush1.bf16.msra.mxu0 %v138
    %999 = vmatprep.subr.bf16.mxu0 0
    %1000 = vmatpush1.bf16.msra.mxu0 %v137
    %1001 = vmatprep.subr.bf16.mxu0 0
    %1002 = vmatpush1.bf16.msra.mxu0 %v136
    %1003 = vmatprep.subr.bf16.mxu0 0
    %1004 = vmatpush2.bf16.msra.mxu0 0
    %1005 = vmatprep.subr.bf16.mxu0 0
    %1006 = vmatpush2.bf16.msra.mxu0 0
    %1007 = vmatprep.subr.bf16.mxu0 0
    %1008 = vmatpush2.bf16.msra.mxu0 0
    %1009 = vmatprep.subr.bf16.mxu0 0
    %1010 = vmatpush2.bf16.msra.mxu0 0
    %1011 = vmatprep.subr.bf16.mxu0 0
    %1012 = vmatpush2.bf16.msra.mxu0 0
    %1013 = vmatprep.subr.bf16.mxu0 0
    %1014 = vmatpush2.bf16.msra.mxu0 0
    %1015 = vmatprep.subr.bf16.mxu0 0
    %1016 = vmatpush2.bf16.msra.mxu0 0
    %1017 = vmatprep.subr.bf16.mxu0 0
    %1018 = vmatpush2.bf16.msra.mxu0 0
    %1019 = vmatprep.mubr.bf16.mxu0 0
    %1020 = vmatmul.mubr.bf16.gmra.mxu0 %v930
    %v1021 = vpop.f32.mrf.mxu0
    %v1022 = vadd.f32 0.0, %v1021
    %v1023 = vpop.f32.mrf.mxu0
    %v1024 = vpop.f32.mrf.mxu0
    %v1025 = vpop.f32.mrf.mxu0
    %1026 = vdwg.mxu0
    %v1029 = vrot.slane %v1022, 7
    %v1030 = vsel %vm888, %v1029, %v974
    %vm1032 = vcmask 254976
    %1033 = vst.msk [vmem:[#allocation2] sm:$0x3] %vm1032, %v1030
    %1034 = vst [vmem:[#allocation4] sm:$0x3] %v903
    // Predicated region
    $region26: #{_attention_forward_impl.1} parent=1 // pred_check
      _
    $region27: #{_attention_forward_impl.1} parent=1 // pred_check_branch
      %1036 = sbr.rel (0) target = $region29
    $region28: #{_attention_forward_impl.1} parent=1 // pred_region
      %s1038 = ssub.s32 32, 32
      %1039 = vsyncadd [#allocation3], %s1038
      %s1041 = sshll.u32 [#allocation2], 4
      %s1042 = int_to_ptr.vmem [resolvable:$true] %s1041
      %1044 = dma.vmem_to_hbm [thread:$0]  %s1042, 32, %s6, [#allocation3]
    $region29: #{_attention_forward_impl.1} parent=1 // pred_fallthru
      _
    // Predicated region
    $region30: #{_attention_forward_impl.1} parent=1 // pred_check
      _
    $region31: #{_attention_forward_impl.1} parent=1 // pred_check_branch
      %1046 = sbr.rel (0) target = $region33
    $region32: #{_attention_forward_impl.1} parent=1 // pred_region
      %s1048 = ssub.s32 32, 32
      %1049 = vsyncadd [#allocation5], %s1048
      %s1051 = sshll.u32 [#allocation4], 4
      %s1052 = int_to_ptr.vmem [resolvable:$true] %s1051
      %1054 = dma.vmem_to_hbm [thread:$0]  %s1052, 32, %s7, [#allocation5]
    $region33: #{_attention_forward_impl.1} parent=1 // pred_fallthru
      _
    // Predicated region
    $region34: #{_attention_forward_impl.1} parent=1 // pred_check
      _
    $region35: #{_attention_forward_impl.1} parent=1 // pred_check_branch
      %1056 = sbr.rel (0) target = $region37
    $region36: #{_attention_forward_impl.1} parent=1 // pred_region
      %1057 = dma.done [#allocation3], 32
    $region37: #{_attention_forward_impl.1} parent=1 // pred_fallthru
      _
    // Predicated region
    $region38: #{_attention_forward_impl.1} parent=1 // pred_check
      _
    $region39: #{_attention_forward_impl.1} parent=1 // pred_check_branch
      %1059 = sbr.rel (0) target = $region41
    $region40: #{_attention_forward_impl.1} parent=1 // pred_region
      %1060 = dma.done [#allocation5], 32
    $region41: #{_attention_forward_impl.1} parent=1 // pred_fallthru
      _
    %1061 = vsyncpa [#allocation3], 1
    %1062 = vsyncpa [#allocation5], 1

</llo_original>
